<compile_context>
chip_gen: v7x
topology: tpu7x:2x2x1
jax: 0.10.0
libtpu: 0.0.40
codegen_flags: <defaults>
</compile_context>

<pallas_src>
import functools

import jax
import jax.numpy as jnp
from jax.experimental import pallas as pl
from jax.experimental.pallas import tpu as pltpu


def _round_up(x, m):
    return (x + m - 1) // m * m


def actor_kernel(x_ref, w1_ref, b1_ref, w2_ref, b2_ref, w3_ref, b3_ref, o_ref):
    # x_ref and w*_ref are bf16; feed them straight to the MXU with f32 accum.
    h1 = jnp.dot(x_ref[...], w1_ref[...], preferred_element_type=jnp.float32)
    h1 = jnp.maximum(h1 + b1_ref[...], 0.0)
    h2 = jnp.dot(h1.astype(jnp.bfloat16), w2_ref[...],
                 preferred_element_type=jnp.float32)
    h2 = jnp.maximum(h2 + b2_ref[...], 0.0)
    h3 = jnp.dot(h2.astype(jnp.bfloat16), w3_ref[...],
                 preferred_element_type=jnp.float32)
    o_ref[...] = jnp.tanh(h3 + b3_ref[...])


@functools.partial(jax.jit, static_argnames=("action_size",))
def actor_forward(state, params, action_size):
    """state: (B, state_size) float32.  params: dict of padded weights/biases."""
    w1, b1, w2, b2, w3, b3 = (
        params["w1"], params["b1"], params["w2"],
        params["b2"], params["w3"], params["b3"],
    )
    B, S = state.shape
    S_pad = w1.shape[0]
    H1 = w1.shape[1]
    H2 = w2.shape[1]
    A_pad = w3.shape[1]

    # Batch tiling (B is static under jit) -- see header comment.
    if B <= 256:
        TB = B
        B_pad = B
    elif B <= 2048:
        TB = _round_up(-(-B // 2), 8)   # 2 grid steps -> shards on v7x megacore
        B_pad = 2 * TB
    else:
        TB = 1024
        B_pad = _round_up(B, TB)

    # Single pad (feature dim always, batch dim only if tiled) + bf16 cast.
    x = jnp.pad(state, ((0, B_pad - B), (0, S_pad - S))).astype(jnp.bfloat16)

    const = lambda i: (0, 0)        # weights/biases resident across batch tiles
    out_pad = pl.pallas_call(
        actor_kernel,
        out_shape=jax.ShapeDtypeStruct((B_pad, A_pad), jnp.float32),
        grid=(B_pad // TB,),
        in_specs=[
            pl.BlockSpec((TB, S_pad), lambda i: (i, 0)),   # x (bf16)
            pl.BlockSpec((S_pad, H1), const),              # w1 (bf16)
            pl.BlockSpec((1, H1), const),                  # b1 (f32)
            pl.BlockSpec((H1, H2), const),                 # w2 (bf16)
            pl.BlockSpec((1, H2), const),                  # b2 (f32)
            pl.BlockSpec((H2, A_pad), const),              # w3 (bf16)
            pl.BlockSpec((1, A_pad), const),               # b3 (f32)
        ],
        out_specs=pl.BlockSpec((TB, A_pad), lambda i: (i, 0)),
        compiler_params=pltpu.CompilerParams(
            dimension_semantics=("parallel",)),
    )(x, w1, b1, w2, b2, w3, b3)

    return out_pad[:B, :action_size]


def init_actor_params(key, state_size, action_size, fc1_units=400, fc2_units=300):
    """Deterministic init mimicking the PyTorch module's reset_parameters().

    Note: the original hidden_init() uses weight.size()[0] (== out_features)
    as fan_in; we reproduce that.  Biases use the default nn.Linear init range
    (1/sqrt(in_features)).  Weights are stored as (in, out) -- transposed
    relative to PyTorch -- zero-padded to TPU-friendly sizes and cast once to
    bfloat16 (biases stay f32).
    """
    k1, k2, k3, kb1, kb2, kb3 = jax.random.split(key, 6)

    lim1 = 1.0 / jnp.sqrt(float(fc1_units))     # hidden_init(fc1)
    lim2 = 1.0 / jnp.sqrt(float(fc2_units))     # hidden_init(fc2)
    lim3 = 3e-3

    blim1 = 1.0 / jnp.sqrt(float(state_size))   # default nn.Linear bias init
    blim2 = 1.0 / jnp.sqrt(float(fc1_units))
    blim3 = 1.0 / jnp.sqrt(float(fc2_units))

    w1 = jax.random.uniform(k1, (state_size, fc1_units), jnp.float32, -lim1, lim1)
    w2 = jax.random.uniform(k2, (fc1_units, fc2_units), jnp.float32, -lim2, lim2)
    w3 = jax.random.uniform(k3, (fc2_units, action_size), jnp.float32, -lim3, lim3)
    b1 = jax.random.uniform(kb1, (fc1_units,), jnp.float32, -blim1, blim1)
    b2 = jax.random.uniform(kb2, (fc2_units,), jnp.float32, -blim2, blim2)
    b3 = jax.random.uniform(kb3, (action_size,), jnp.float32, -blim3, blim3)

    # State dim is a sublane dim of the bf16 W1 -> pad to multiple of 16.
    S_pad = _round_up(state_size, 16)
    H1_pad = _round_up(fc1_units, 128)
    H2_pad = _round_up(fc2_units, 128)
    A_pad = _round_up(action_size, 128)

    def pad_w(w, r, c):
        return (jnp.zeros((r, c), jnp.float32)
                .at[: w.shape[0], : w.shape[1]].set(w)
                .astype(jnp.bfloat16))

    def pad_bias(b, c):
        return jnp.zeros((1, c), jnp.float32).at[0, : b.shape[0]].set(b)

    return {
        "w1": pad_w(w1, S_pad, H1_pad), "b1": pad_bias(b1, H1_pad),
        "w2": pad_w(w2, H1_pad, H2_pad), "b2": pad_bias(b2, H2_pad),
        "w3": pad_w(w3, H2_pad, A_pad), "b3": pad_bias(b3, A_pad),
    }


def actor_reference(state, params, state_size, action_size,
                    fc1_units=400, fc2_units=300):
    """Pure-JAX f32 reference using the unpadded slices of the padded params."""
    w1 = params["w1"][:state_size, :fc1_units].astype(jnp.float32)
    b1 = params["b1"][0, :fc1_units]
    w2 = params["w2"][:fc1_units, :fc2_units].astype(jnp.float32)
    b2 = params["b2"][0, :fc2_units]
    w3 = params["w3"][:fc2_units, :action_size].astype(jnp.float32)
    b3 = params["b3"][0, :action_size]
    h1 = jnp.maximum(state @ w1 + b1, 0.0)
    h2 = jnp.maximum(h1 @ w2 + b2, 0.0)
    return jnp.tanh(h2 @ w3 + b3)


if __name__ == "__main__":
    state_size = 2      # MountainCarContinuous state dim
    action_size = 3
    fc1_units = 400
    fc2_units = 300

    key = jax.random.PRNGKey(0)
    kp, kx1, kx2 = jax.random.split(key, 3)

    params = init_actor_params(kp, state_size, action_size, fc1_units, fc2_units)

    # Tolerances: kernel runs bf16 x bf16 -> f32 matmuls (activations cast to
    # bf16 per layer); reference keeps f32 activations -> ~0.2-0.5% deltas.
    ATOL = 1e-2
    RTOL = 1e-2

    # Small inference-style batch (single block, no batch padding).
    state_small = jax.random.normal(kx1, (4, state_size), jnp.float32)
    out_small = jax.block_until_ready(actor_forward(state_small, params, action_size))
    ref_small = actor_reference(state_small, params, state_size, action_size,
                                fc1_units, fc2_units)
    assert out_small.shape == (4, action_size), out_small.shape
    assert jnp.allclose(out_small, ref_small, atol=ATOL, rtol=RTOL), (out_small, ref_small)

    # Replay-style batch (two batch tiles, resident weights, v7x 2-TC path).
    state_big = jax.random.normal(kx2, (333, state_size), jnp.float32)
    out_big = jax.block_until_ready(actor_forward(state_big, params, action_size))
    ref_big = actor_reference(state_big, params, state_size, action_size,
                              fc1_units, fc2_units)
    assert out_big.shape == (333, action_size), out_big.shape
    assert jnp.allclose(out_big, ref_big, atol=ATOL, rtol=RTOL), (out_big, ref_big)

    print("KERNEL_OK")
</pallas_src>

<mosaic_0001>
module attributes {stable_mosaic.version = 11 : i64} {
  func.func @actor_kernel(%arg0: i32, %arg1: memref<4x16xbf16, #tpu.memory_space<vmem>>, %arg2: memref<16x512xbf16, #tpu.memory_space<vmem>>, %arg3: memref<1x512xf32, #tpu.memory_space<vmem>>, %arg4: memref<512x384xbf16, #tpu.memory_space<vmem>>, %arg5: memref<1x384xf32, #tpu.memory_space<vmem>>, %arg6: memref<384x128xbf16, #tpu.memory_space<vmem>>, %arg7: memref<1x128xf32, #tpu.memory_space<vmem>>, %arg8: memref<4x128xf32, #tpu.memory_space<vmem>>) attributes {dimension_semantics = [#tpu.dimension_semantics<parallel>], iteration_bounds = array<i64: 1>, scalar_prefetch = 0 : i64, scratch_operands = 0 : i64, tpu.core_type = #tpu.core_type<tc>, window_params = [{transform_indices = @transform_0, window_bounds = array<i64: 4, 16>}, {pipeline_mode = #tpu.pipeline_mode<synchronous>, transform_indices = @transform_1, window_bounds = array<i64: 16, 512>}, {pipeline_mode = #tpu.pipeline_mode<synchronous>, transform_indices = @transform_2, window_bounds = array<i64: 1, 512>}, {pipeline_mode = #tpu.pipeline_mode<synchronous>, transform_indices = @transform_3, window_bounds = array<i64: 512, 384>}, {pipeline_mode = #tpu.pipeline_mode<synchronous>, transform_indices = @transform_4, window_bounds = array<i64: 1, 384>}, {pipeline_mode = #tpu.pipeline_mode<synchronous>, transform_indices = @transform_5, window_bounds = array<i64: 384, 128>}, {pipeline_mode = #tpu.pipeline_mode<synchronous>, transform_indices = @transform_6, window_bounds = array<i64: 1, 128>}, {transform_indices = @transform_7, window_bounds = array<i64: 4, 128>}]} {
    %c0 = arith.constant 0 : index
    %c0_0 = arith.constant 0 : index
    %0 = vector.load %arg1[%c0, %c0_0] : memref<4x16xbf16, #tpu.memory_space<vmem>>, vector<4x16xbf16>
    %c0_1 = arith.constant 0 : index
    %c0_2 = arith.constant 0 : index
    %1 = vector.load %arg2[%c0_1, %c0_2] : memref<16x512xbf16, #tpu.memory_space<vmem>>, vector<16x512xbf16>
    %cst = arith.constant dense<0.000000e+00> : vector<4x512xf32>
    %2 = tpu.matmul %0, %1, %cst {dimension_numbers = #tpu.dot_dimension_numbers<[1], [0], [0], [1], [0, 0, 1, 1], [], []>} : vector<4x16xbf16>, vector<16x512xbf16>, vector<4x512xf32> -> vector<4x512xf32>
    %c0_3 = arith.constant 0 : index
    %c0_4 = arith.constant 0 : index
    %3 = vector.load %arg3[%c0_3, %c0_4] : memref<1x512xf32, #tpu.memory_space<vmem>>, vector<1x512xf32>
    %4 = vector.broadcast %3 : vector<1x512xf32> to vector<4x512xf32>
    %5 = arith.addf %2, %4 : vector<4x512xf32>
    %cst_5 = arith.constant 0.000000e+00 : f32
    %6 = vector.broadcast %cst_5 : f32 to vector<4x512xf32>
    %7 = arith.maximumf %5, %6 : vector<4x512xf32>
    %8 = arith.truncf %7 : vector<4x512xf32> to vector<4x512xbf16>
    %c0_6 = arith.constant 0 : index
    %c0_7 = arith.constant 0 : index
    %9 = vector.load %arg4[%c0_6, %c0_7] : memref<512x384xbf16, #tpu.memory_space<vmem>>, vector<512x384xbf16>
    %cst_8 = arith.constant dense<0.000000e+00> : vector<4x384xf32>
    %10 = tpu.matmul %8, %9, %cst_8 {dimension_numbers = #tpu.dot_dimension_numbers<[1], [0], [0], [1], [0, 0, 1, 1], [], []>} : vector<4x512xbf16>, vector<512x384xbf16>, vector<4x384xf32> -> vector<4x384xf32>
    %c0_9 = arith.constant 0 : index
    %c0_10 = arith.constant 0 : index
    %11 = vector.load %arg5[%c0_9, %c0_10] : memref<1x384xf32, #tpu.memory_space<vmem>>, vector<1x384xf32>
    %12 = vector.broadcast %11 : vector<1x384xf32> to vector<4x384xf32>
    %13 = arith.addf %10, %12 : vector<4x384xf32>
    %cst_11 = arith.constant 0.000000e+00 : f32
    %14 = vector.broadcast %cst_11 : f32 to vector<4x384xf32>
    %15 = arith.maximumf %13, %14 : vector<4x384xf32>
    %16 = arith.truncf %15 : vector<4x384xf32> to vector<4x384xbf16>
    %c0_12 = arith.constant 0 : index
    %c0_13 = arith.constant 0 : index
    %17 = vector.load %arg6[%c0_12, %c0_13] : memref<384x128xbf16, #tpu.memory_space<vmem>>, vector<384x128xbf16>
    %cst_14 = arith.constant dense<0.000000e+00> : vector<4x128xf32>
    %18 = tpu.matmul %16, %17, %cst_14 {dimension_numbers = #tpu.dot_dimension_numbers<[1], [0], [0], [1], [0, 0, 1, 1], [], []>} : vector<4x384xbf16>, vector<384x128xbf16>, vector<4x128xf32> -> vector<4x128xf32>
    %c0_15 = arith.constant 0 : index
    %c0_16 = arith.constant 0 : index
    %19 = vector.load %arg7[%c0_15, %c0_16] : memref<1x128xf32, #tpu.memory_space<vmem>>, vector<1x128xf32>
    %20 = vector.broadcast %19 : vector<1x128xf32> to vector<4x128xf32>
    %21 = arith.addf %18, %20 : vector<4x128xf32>
    %22 = math.tanh %21 : vector<4x128xf32>
    %c0_17 = arith.constant 0 : index
    %c0_18 = arith.constant 0 : index
    %23 = vector.load %arg8[%c0_17, %c0_18] : memref<4x128xf32, #tpu.memory_space<vmem>>, vector<4x128xf32>
    tpu.vector_store %arg8[%c0_17, %c0_18], %22 {strides = array<i32>} : memref<4x128xf32, #tpu.memory_space<vmem>>, vector<4x128xf32>,
    return
  }
  func.func @transform_0(%arg0: i32) -> (i32, i32) {
    %c0_i32 = arith.constant 0 : i32
    %c0_i32_0 = arith.constant 0 : i32
    return %arg0, %c0_i32 : i32, i32
  }
  func.func @transform_1(%arg0: i32) -> (i32, i32) {
    %c0_i32 = arith.constant 0 : i32
    %c0_i32_0 = arith.constant 0 : i32
    %c0_i32_1 = arith.constant 0 : i32
    return %c0_i32, %c0_i32_0 : i32, i32
  }
  func.func @transform_2(%arg0: i32) -> (i32, i32) {
    %c0_i32 = arith.constant 0 : i32
    %c0_i32_0 = arith.constant 0 : i32
    %c0_i32_1 = arith.constant 0 : i32
    return %c0_i32, %c0_i32_0 : i32, i32
  }
  func.func @transform_3(%arg0: i32) -> (i32, i32) {
    %c0_i32 = arith.constant 0 : i32
    %c0_i32_0 = arith.constant 0 : i32
    %c0_i32_1 = arith.constant 0 : i32
    return %c0_i32, %c0_i32_0 : i32, i32
  }
  func.func @transform_4(%arg0: i32) -> (i32, i32) {
    %c0_i32 = arith.constant 0 : i32
    %c0_i32_0 = arith.constant 0 : i32
    %c0_i32_1 = arith.constant 0 : i32
    return %c0_i32, %c0_i32_0 : i32, i32
  }
  func.func @transform_5(%arg0: i32) -> (i32, i32) {
    %c0_i32 = arith.constant 0 : i32
    %c0_i32_0 = arith.constant 0 : i32
    %c0_i32_1 = arith.constant 0 : i32
    return %c0_i32, %c0_i32_0 : i32, i32
  }
  func.func @transform_6(%arg0: i32) -> (i32, i32) {
    %c0_i32 = arith.constant 0 : i32
    %c0_i32_0 = arith.constant 0 : i32
    %c0_i32_1 = arith.constant 0 : i32
    return %c0_i32, %c0_i32_0 : i32, i32
  }
  func.func @transform_7(%arg0: i32) -> (i32, i32) {
    %c0_i32 = arith.constant 0 : i32
    %c0_i32_0 = arith.constant 0 : i32
    return %arg0, %c0_i32 : i32, i32
  }
}

</mosaic_0001>

<llo_original>
// kernel: actor_forward.1
$region0: #{actor_forward.1}
  #allocation0 [shape = 'u32[]', space=smem, size = 0x4, offset = 0x4, fixed_abs, tag = 'smem constant byte address 0x4 - core index']
  #allocation1 [shape = 'u32[144,128]{1,0:T(1,128)}', space=vmem, size = 0x12000, scoped, tag = 'internal scratch']
  %s0 = inlined_call_operand.vmem [shape: bf16[4,16], index: 0, kind: input, shape index: {}]
  %s1 = inlined_call_operand.hbm [shape: bf16[16,512], index: 1, kind: input, shape index: {}]
  %s2 = inlined_call_operand.vmem [shape: f32[1,512], index: 2, kind: input, shape index: {}]
  %s3 = inlined_call_operand.hbm [shape: bf16[512,384], index: 3, kind: input, shape index: {}]
  %s4 = inlined_call_operand.vmem [shape: f32[1,384], index: 4, kind: input, shape index: {}]
  %s5 = inlined_call_operand.hbm [shape: bf16[384,128], index: 5, kind: input, shape index: {}]
  %s6 = inlined_call_operand.vmem [shape: f32[1,128], index: 6, kind: input, shape index: {}]
  %s7 = inlined_call_operand.hbm [shape: f32[4,128], index: 7, kind: output, shape index: {}]
  %s8 = sld [smem:[#allocation0]]
  $region50: #{actor_forward.1} parent=0
    _
  %s10 = ssub.s32 1, %s8
  %s11 = scalar_select 0, %s10, %s8
  $region1: #{actor_forward.1} parent=0
    #allocation2 [shape = 'u8[16384]{0}', space=vmem, size = 0x4000, scoped, tag = 'input window, operand 1, single buffered']
    #allocation3 [shape = 's32[1]{0}', space=sflag, size = 0x4, scoped, tag = 'scoped memory for actor_forward.1']
    #allocation4 [shape = 's32[1]{0}', space=sflag, size = 0x4, scoped, tag = 'scoped memory for actor_forward.1']
    #allocation5 [shape = 'u8[393216]{0}', space=vmem, size = 0x60000, scoped, tag = 'input window, operand 3, single buffered']
    #allocation6 [shape = 's32[1]{0}', space=sflag, size = 0x4, scoped, tag = 'scoped memory for actor_forward.1']
    #allocation7 [shape = 'u8[98304]{0}', space=vmem, size = 0x18000, scoped, tag = 'input window, operand 5, single buffered']
    #allocation8 [shape = 'u8[2048]{0}', space=vmem, size = 0x800, scoped, tag = 'output window, operand 0, single buffered']
    %12 = vsyncpa [#allocation3], 0
    %13 = vsyncpa [#allocation6], 0
    %14 = vsyncpa [#allocation4], 0
    // Predicated region
    $region2: #{actor_forward.1} parent=1 // pred_check
      _
    $region3: #{actor_forward.1} parent=1 // pred_check_branch
      %16 = sbr.rel (0) target = $region5
    $region4: #{actor_forward.1} parent=1 // pred_region
      _
    $region5: #{actor_forward.1} parent=1 // pred_fallthru
      _
    // Predicated region
    $region6: #{actor_forward.1} parent=1 // pred_check
      _
    $region7: #{actor_forward.1} parent=1 // pred_check_branch
      %18 = sbr.rel (0) target = $region9
    $region8: #{actor_forward.1} parent=1 // pred_region
      %s20 = ssub.s32 512, 512
      %21 = vsyncadd [#allocation3], %s20
      %s22 = sshll.u32 [#allocation2], 4
      %s23 = int_to_ptr.vmem [resolvable:$true] %s22
      %28 = dma.hbm_to_vmem [thread:$0]  %s1, 512, %s23, [#allocation3], 256, 256, 16
    $region9: #{actor_forward.1} parent=1 // pred_fallthru
      _
    // Predicated region
    $region10: #{actor_forward.1} parent=1 // pred_check
      _
    $region11: #{actor_forward.1} parent=1 // pred_check_branch
      %30 = sbr.rel (0) target = $region13
    $region12: #{actor_forward.1} parent=1 // pred_region
      _
    $region13: #{actor_forward.1} parent=1 // pred_fallthru
      _
    // Predicated region
    $region14: #{actor_forward.1} parent=1 // pred_check
      _
    $region15: #{actor_forward.1} parent=1 // pred_check_branch
      %32 = sbr.rel (0) target = $region17
    $region16: #{actor_forward.1} parent=1 // pred_region
      %s34 = ssub.s32 12288, 12288
      %35 = vsyncadd [#allocation6], %s34
      %s36 = sshll.u32 [#allocation5], 4
      %s37 = int_to_ptr.vmem [resolvable:$true] %s36
      %42 = dma.hbm_to_vmem [thread:$0]  %s3, 12288, %s37, [#allocation6], 192, 192, 12
    $region17: #{actor_forward.1} parent=1 // pred_fallthru
      _
    // Predicated region
    $region18: #{actor_forward.1} parent=1 // pred_check
      _
    $region19: #{actor_forward.1} parent=1 // pred_check_branch
      %44 = sbr.rel (0) target = $region21
    $region20: #{actor_forward.1} parent=1 // pred_region
      _
    $region21: #{actor_forward.1} parent=1 // pred_fallthru
      _
    // Predicated region
    $region22: #{actor_forward.1} parent=1 // pred_check
      _
    $region23: #{actor_forward.1} parent=1 // pred_check_branch
      %46 = sbr.rel (0) target = $region25
    $region24: #{actor_forward.1} parent=1 // pred_region
      %s48 = ssub.s32 3072, 3072
      %49 = vsyncadd [#allocation6], %s48
      %s50 = sshll.u32 [#allocation7], 4
      %s51 = int_to_ptr.vmem [resolvable:$true] %s50
      %56 = dma.hbm_to_vmem [thread:$0]  %s5, 3072, %s51, [#allocation6], 64, 64, 4
    $region25: #{actor_forward.1} parent=1 // pred_fallthru
      _
    // Predicated region
    $region26: #{actor_forward.1} parent=1 // pred_check
      _
    $region27: #{actor_forward.1} parent=1 // pred_check_branch
      %58 = sbr.rel (0) target = $region29
    $region28: #{actor_forward.1} parent=1 // pred_region
      _
    $region29: #{actor_forward.1} parent=1 // pred_fallthru
      _
    // Predicated region
    $region30: #{actor_forward.1} parent=1 // pred_check
      _
    $region31: #{actor_forward.1} parent=1 // pred_check_branch
      %60 = sbr.rel (0) target = $region33
    $region32: #{actor_forward.1} parent=1 // pred_region
      %61 = dma.done [#allocation3], 512
    $region33: #{actor_forward.1} parent=1 // pred_fallthru
      _
    // Predicated region
    $region34: #{actor_forward.1} parent=1 // pred_check
      _
    $region35: #{actor_forward.1} parent=1 // pred_check_branch
      %63 = sbr.rel (0) target = $region37
    $region36: #{actor_forward.1} parent=1 // pred_region
      %64 = dma.done [#allocation6], 12288
    $region37: #{actor_forward.1} parent=1 // pred_fallthru
      _
    // Predicated region
    $region38: #{actor_forward.1} parent=1 // pred_check
      _
    $region39: #{actor_forward.1} parent=1 // pred_check_branch
      %66 = sbr.rel (0) target = $region41
    $region40: #{actor_forward.1} parent=1 // pred_region
      %67 = dma.done [#allocation6], 3072
    $region41: #{actor_forward.1} parent=1 // pred_fallthru
      _
    %v69 = vld [vmem:[%s0] sm:$0x3]
    %v70 = vld [vmem:[#allocation2] sm:$0xff]
    %v71 = vld [vmem:[#allocation2 + $0x8] sm:$0xff]
    %v72 = vld [vmem:[#allocation2 + $0x10] sm:$0xff]
    %v73 = vld [vmem:[#allocation2 + $0x18] sm:$0xff]
    %v74 = vld [vmem:[%s2] sm:$0xf]
    %v76 = vlaneseq
    %v77 = vshrl.u32 %v76, 7
    %v78 = vsub.s32 0, %v77
    %v79 = vrot.slane %v74, %v78
    %v80 = vlaneseq
    %v81 = vshrl.u32 %v80, 7
    %v82 = vsub.s32 1, %v81
    %v83 = vrot.slane %v74, %v82
    %v84 = vlaneseq
    %v85 = vshrl.u32 %v84, 7
    %v86 = vsub.s32 2, %v85
    %v87 = vrot.slane %v74, %v86
    %v88 = vlaneseq
    %v89 = vshrl.u32 %v88, 7
    %v90 = vsub.s32 3, %v89
    %v91 = vrot.slane %v74, %v90
    %v100 = vunpack.c.l.b16 %v70
    %v101 = vunpack.c.h.b16 %v70
    %v102 = vunpack.c.l.b16 %v71
    %v103 = vunpack.c.h.b16 %v71
    %v104 = vunpack.c.l.b16 %v72
    %v105 = vunpack.c.h.b16 %v72
    %v106 = vunpack.c.l.b16 %v73
    %v107 = vunpack.c.h.b16 %v73
    %v108 = vpack.c.b16 %v104, %v100
    %v109 = vpack.c.b16 %v105, %v101
    %v110 = vpack.c.b16 %v106, %v102
    %v111 = vpack.c.b16 %v107, %v103
    %vm116 = vcmask 130048
    %v118 = vsel %vm116, %v69, 0
    %120 = vmatprep.subr.bf16.mxu0 %v109
    %121 = vmatpush1.bf16.msra.mxu0 %v108
    %122 = vmatprep.subr.bf16.mxu0 0
    %123 = vmatpush1.bf16.msra.mxu0 0
    %124 = vmatprep.subr.bf16.mxu0 0
    %125 = vmatpush1.bf16.msra.mxu0 0
    %126 = vmatprep.subr.bf16.mxu0 0
    %127 = vmatpush1.bf16.msra.mxu0 0
    %128 = vmatprep.subr.bf16.mxu0 0
    %129 = vmatpush1.bf16.msra.mxu0 0
    %130 = vmatprep.subr.bf16.mxu0 0
    %131 = vmatpush1.bf16.msra.mxu0 0
    %132 = vmatprep.subr.bf16.mxu0 0
    %133 = vmatpush1.bf16.msra.mxu0 0
    %134 = vmatprep.subr.bf16.mxu0 0
    %135 = vmatpush1.bf16.msra.mxu0 0
    %136 = vmatprep.subr.bf16.mxu0 0
    %137 = vmatpush1.bf16.msra.mxu0 0
    %138 = vmatprep.subr.bf16.mxu0 0
    %139 = vmatpush1.bf16.msra.mxu0 0
    %140 = vmatprep.subr.bf16.mxu0 0
    %141 = vmatpush1.bf16.msra.mxu0 0
    %142 = vmatprep.subr.bf16.mxu0 0
    %143 = vmatpush1.bf16.msra.mxu0 0
    %144 = vmatprep.subr.bf16.mxu0 0
    %145 = vmatpush1.bf16.msra.mxu0 0
    %146 = vmatprep.subr.bf16.mxu0 0
    %147 = vmatpush1.bf16.msra.mxu0 0
    %148 = vmatprep.subr.bf16.mxu0 0
    %149 = vmatpush1.bf16.msra.mxu0 0
    %150 = vmatprep.subr.bf16.mxu0 0
    %151 = vmatpush1.bf16.msra.mxu0 0
    %152 = vmatprep.mubr.bf16.mxu0 0
    %153 = vmatmul.mubr.bf16.gmra.mrb[0].mxu0 %v118
    %v154 = vpop.f32.mrb[0].mxu0
    %v155 = vadd.f32 %v79, %v154
    %v156 = vpop.f32.mrb[0].mxu0
    %v157 = vadd.f32 %v83, %v156
    %v158 = vpop.f32.mrb[0].mxu0
    %v159 = vpop.f32.mrb[0].mxu0
    %160 = vdwg.mxu0
    %161 = vmatprep.subr.bf16.mxu0 %v111
    %162 = vmatpush1.bf16.msra.mxu0 %v110
    %163 = vmatprep.subr.bf16.mxu0 0
    %164 = vmatpush1.bf16.msra.mxu0 0
    %165 = vmatprep.subr.bf16.mxu0 0
    %166 = vmatpush1.bf16.msra.mxu0 0
    %167 = vmatprep.subr.bf16.mxu0 0
    %168 = vmatpush1.bf16.msra.mxu0 0
    %169 = vmatprep.subr.bf16.mxu0 0
    %170 = vmatpush1.bf16.msra.mxu0 0
    %171 = vmatprep.subr.bf16.mxu0 0
    %172 = vmatpush1.bf16.msra.mxu0 0
    %173 = vmatprep.subr.bf16.mxu0 0
    %174 = vmatpush1.bf16.msra.mxu0 0
    %175 = vmatprep.subr.bf16.mxu0 0
    %176 = vmatpush1.bf16.msra.mxu0 0
    %177 = vmatprep.subr.bf16.mxu0 0
    %178 = vmatpush1.bf16.msra.mxu0 0
    %179 = vmatprep.subr.bf16.mxu0 0
    %180 = vmatpush1.bf16.msra.mxu0 0
    %181 = vmatprep.subr.bf16.mxu0 0
    %182 = vmatpush1.bf16.msra.mxu0 0
    %183 = vmatprep.subr.bf16.mxu0 0
    %184 = vmatpush1.bf16.msra.mxu0 0
    %185 = vmatprep.subr.bf16.mxu0 0
    %186 = vmatpush1.bf16.msra.mxu0 0
    %187 = vmatprep.subr.bf16.mxu0 0
    %188 = vmatpush1.bf16.msra.mxu0 0
    %189 = vmatprep.subr.bf16.mxu0 0
    %190 = vmatpush1.bf16.msra.mxu0 0
    %191 = vmatprep.subr.bf16.mxu0 0
    %192 = vmatpush1.bf16.msra.mxu0 0
    %193 = vmatprep.mubr.bf16.mxu0 0
    %194 = vmatmul.mubr.bf16.gmra.mrb[0].mxu0 %v118
    %v195 = vpop.f32.mrb[0].mxu0
    %v196 = vadd.f32 %v87, %v195
    %v197 = vpop.f32.mrb[0].mxu0
    %v198 = vadd.f32 %v91, %v197
    %v199 = vpop.f32.mrb[0].mxu0
    %v200 = vpop.f32.mrb[0].mxu0
    %201 = vdwg.mxu0
    %v202 = vmax.f32 %v155, 0.0
    %v203 = vmax.f32 %v157, 0.0
    %v204 = vmax.f32 %v196, 0.0
    %v205 = vmax.f32 %v198, 0.0
    %v206 = vpack.c.bf16 %v202, %v202
    %v207 = vpack.c.bf16 %v203, %v203
    %v208 = vpack.c.bf16 %v204, %v204
    %v209 = vpack.c.bf16 %v205, %v205
    %v210 = vld [vmem:[#allocation5] sm:$0xff]
    %v211 = vld [vmem:[#allocation5 + $0x8] sm:$0xf]
    %v212 = vld [vmem:[#allocation5 + $0xc] sm:$0xff]
    %v213 = vld [vmem:[#allocation5 + $0x14] sm:$0xf]
    %v214 = vld [vmem:[#allocation5 + $0x18] sm:$0xff]
    %v215 = vld [vmem:[#allocation5 + $0x20] sm:$0xf]
    %v216 = vld [vmem:[#allocation5 + $0x24] sm:$0xff]
    %v217 = vld [vmem:[#allocation5 + $0x2c] sm:$0xf]
    %v218 = vld [vmem:[#allocation5 + $0x30] sm:$0xff]
    %v219 = vld [vmem:[#allocation5 + $0x38] sm:$0xf]
    %v220 = vld [vmem:[#allocation5 + $0x3c] sm:$0xff]
    %v221 = vld [vmem:[#allocation5 + $0x44] sm:$0xf]
    %v222 = vld [vmem:[#allocation5 + $0x48] sm:$0xff]
    %v223 = vld [vmem:[#allocation5 + $0x50] sm:$0xf]
    %v224 = vld [vmem:[#allocation5 + $0x54] sm:$0xff]
    %v225 = vld [vmem:[#allocation5 + $0x5c] sm:$0xf]
    %v226 = vld [vmem:[#allocation5 + $0x60] sm:$0xff]
    %v227 = vld [vmem:[#allocation5 + $0x68] sm:$0xf]
    %v228 = vld [vmem:[#allocation5 + $0x6c] sm:$0xff]
    %v229 = vld [vmem:[#allocation5 + $0x74] sm:$0xf]
    %v230 = vld [vmem:[#allocation5 + $0x78] sm:$0xff]
    %v231 = vld [vmem:[#allocation5 + $0x80] sm:$0xf]
    %v232 = vld [vmem:[#allocation5 + $0x84] sm:$0xff]
    %v233 = vld [vmem:[#allocation5 + $0x8c] sm:$0xf]
    %v234 = vld [vmem:[#allocation5 + $0x90] sm:$0xff]
    %v235 = vld [vmem:[#allocation5 + $0x98] sm:$0xf]
    %v236 = vld [vmem:[#allocation5 + $0x9c] sm:$0xff]
    %v237 = vld [vmem:[#allocation5 + $0xa4] sm:$0xf]
    %v238 = vld [vmem:[#allocation5 + $0xa8] sm:$0xff]
    %v239 = vld [vmem:[#allocation5 + $0xb0] sm:$0xf]
    %v240 = vld [vmem:[#allocation5 + $0xb4] sm:$0xff]
    %v241 = vld [vmem:[#allocation5 + $0xbc] sm:$0xf]
    %v242 = vld [vmem:[#allocation5 + $0xc0] sm:$0xff]
    %v243 = vld [vmem:[#allocation5 + $0xc8] sm:$0xf]
    %v244 = vld [vmem:[#allocation5 + $0xcc] sm:$0xff]
    %v245 = vld [vmem:[#allocation5 + $0xd4] sm:$0xf]
    %v246 = vld [vmem:[#allocation5 + $0xd8] sm:$0xff]
    %v247 = vld [vmem:[#allocation5 + $0xe0] sm:$0xf]
    %v248 = vld [vmem:[#allocation5 + $0xe4] sm:$0xff]
    %v249 = vld [vmem:[#allocation5 + $0xec] sm:$0xf]
    %v250 = vld [vmem:[#allocation5 + $0xf0] sm:$0xff]
    %v251 = vld [vmem:[#allocation5 + $0xf8] sm:$0xf]
    %v252 = vld [vmem:[#allocation5 + $0xfc] sm:$0xff]
    %v253 = vld [vmem:[#allocation5 + $0x104] sm:$0xf]
    %v254 = vld [vmem:[#allocation5 + $0x108] sm:$0xff]
    %v255 = vld [vmem:[#allocation5 + $0x110] sm:$0xf]
    %v256 = vld [vmem:[#allocation5 + $0x114] sm:$0xff]
    %v257 = vld [vmem:[#allocation5 + $0x11c] sm:$0xf]
    %v258 = vld [vmem:[#allocation5 + $0x120] sm:$0xff]
    %v259 = vld [vmem:[#allocation5 + $0x128] sm:$0xf]
    %v260 = vld [vmem:[#allocation5 + $0x12c] sm:$0xff]
    %v261 = vld [vmem:[#allocation5 + $0x134] sm:$0xf]
    %v262 = vld [vmem:[#allocation5 + $0x138] sm:$0xff]
    %v263 = vld [vmem:[#allocation5 + $0x140] sm:$0xf]
    %v264 = vld [vmem:[#allocation5 + $0x144] sm:$0xff]
    %v265 = vld [vmem:[#allocation5 + $0x14c] sm:$0xf]
    %v266 = vld [vmem:[#allocation5 + $0x150] sm:$0xff]
    %v267 = vld [vmem:[#allocation5 + $0x158] sm:$0xf]
    %v268 = vld [vmem:[#allocation5 + $0x15c] sm:$0xff]
    %v269 = vld [vmem:[#allocation5 + $0x164] sm:$0xf]
    %v270 = vld [vmem:[#allocation5 + $0x168] sm:$0xff]
    %v271 = vld [vmem:[#allocation5 + $0x170] sm:$0xf]
    %v272 = vld [vmem:[#allocation5 + $0x174] sm:$0xff]
    %v273 = vld [vmem:[#allocation5 + $0x17c] sm:$0xf]
    %v274 = vld [vmem:[#allocation5 + $0x180] sm:$0xff]
    %v275 = vld [vmem:[#allocation5 + $0x188] sm:$0xf]
    %v276 = vld [vmem:[#allocation5 + $0x18c] sm:$0xff]
    %v277 = vld [vmem:[#allocation5 + $0x194] sm:$0xf]
    %v278 = vld [vmem:[#allocation5 + $0x198] sm:$0xff]
    %v279 = vld [vmem:[#allocation5 + $0x1a0] sm:$0xf]
    %v280 = vld [vmem:[#allocation5 + $0x1a4] sm:$0xff]
    %v281 = vld [vmem:[#allocation5 + $0x1ac] sm:$0xf]
    %v282 = vld [vmem:[#allocation5 + $0x1b0] sm:$0xff]
    %v283 = vld [vmem:[#allocation5 + $0x1b8] sm:$0xf]
    %v284 = vld [vmem:[#allocation5 + $0x1bc] sm:$0xff]
    %v285 = vld [vmem:[#allocation5 + $0x1c4] sm:$0xf]
    %v286 = vld [vmem:[#allocation5 + $0x1c8] sm:$0xff]
    %v287 = vld [vmem:[#allocation5 + $0x1d0] sm:$0xf]
    %v288 = vld [vmem:[#allocation5 + $0x1d4] sm:$0xff]
    %v289 = vld [vmem:[#allocation5 + $0x1dc] sm:$0xf]
    %v290 = vld [vmem:[#allocation5 + $0x1e0] sm:$0xff]
    %v291 = vld [vmem:[#allocation5 + $0x1e8] sm:$0xf]
    %v292 = vld [vmem:[#allocation5 + $0x1ec] sm:$0xff]
    %v293 = vld [vmem:[#allocation5 + $0x1f4] sm:$0xf]
    %v294 = vld [vmem:[#allocation5 + $0x1f8] sm:$0xff]
    %v295 = vld [vmem:[#allocation5 + $0x200] sm:$0xf]
    %v296 = vld [vmem:[#allocation5 + $0x204] sm:$0xff]
    %v297 = vld [vmem:[#allocation5 + $0x20c] sm:$0xf]
    %v298 = vld [vmem:[#allocation5 + $0x210] sm:$0xff]
    %v299 = vld [vmem:[#allocation5 + $0x218] sm:$0xf]
    %v300 = vld [vmem:[#allocation5 + $0x21c] sm:$0xff]
    %v301 = vld [vmem:[#allocation5 + $0x224] sm:$0xf]
    %v302 = vld [vmem:[#allocation5 + $0x228] sm:$0xff]
    %v303 = vld [vmem:[#allocation5 + $0x230] sm:$0xf]
    %v304 = vld [vmem:[#allocation5 + $0x234] sm:$0xff]
    %v305 = vld [vmem:[#allocation5 + $0x23c] sm:$0xf]
    %v306 = vld [vmem:[#allocation5 + $0x240] sm:$0xff]
    %v307 = vld [vmem:[#allocation5 + $0x248] sm:$0xf]
    %v308 = vld [vmem:[#allocation5 + $0x24c] sm:$0xff]
    %v309 = vld [vmem:[#allocation5 + $0x254] sm:$0xf]
    %v310 = vld [vmem:[#allocation5 + $0x258] sm:$0xff]
    %v311 = vld [vmem:[#allocation5 + $0x260] sm:$0xf]
    %v312 = vld [vmem:[#allocation5 + $0x264] sm:$0xff]
    %v313 = vld [vmem:[#allocation5 + $0x26c] sm:$0xf]
    %v314 = vld [vmem:[#allocation5 + $0x270] sm:$0xff]
    %v315 = vld [vmem:[#allocation5 + $0x278] sm:$0xf]
    %v316 = vld [vmem:[#allocation5 + $0x27c] sm:$0xff]
    %v317 = vld [vmem:[#allocation5 + $0x284] sm:$0xf]
    %v318 = vld [vmem:[#allocation5 + $0x288] sm:$0xff]
    %v319 = vld [vmem:[#allocation5 + $0x290] sm:$0xf]
    %v320 = vld [vmem:[#allocation5 + $0x294] sm:$0xff]
    %v321 = vld [vmem:[#allocation5 + $0x29c] sm:$0xf]
    %v322 = vld [vmem:[#allocation5 + $0x2a0] sm:$0xff]
    %v323 = vld [vmem:[#allocation5 + $0x2a8] sm:$0xf]
    %v324 = vld [vmem:[#allocation5 + $0x2ac] sm:$0xff]
    %v325 = vld [vmem:[#allocation5 + $0x2b4] sm:$0xf]
    %v326 = vld [vmem:[#allocation5 + $0x2b8] sm:$0xff]
    %v327 = vld [vmem:[#allocation5 + $0x2c0] sm:$0xf]
    %v328 = vld [vmem:[#allocation5 + $0x2c4] sm:$0xff]
    %v329 = vld [vmem:[#allocation5 + $0x2cc] sm:$0xf]
    %v330 = vld [vmem:[#allocation5 + $0x2d0] sm:$0xff]
    %v331 = vld [vmem:[#allocation5 + $0x2d8] sm:$0xf]
    %v332 = vld [vmem:[#allocation5 + $0x2dc] sm:$0xff]
    %v333 = vld [vmem:[#allocation5 + $0x2e4] sm:$0xf]
    %v334 = vld [vmem:[#allocation5 + $0x2e8] sm:$0xff]
    %v335 = vld [vmem:[#allocation5 + $0x2f0] sm:$0xf]
    %v336 = vld [vmem:[#allocation5 + $0x2f4] sm:$0xff]
    %v337 = vld [vmem:[#allocation5 + $0x2fc] sm:$0xf]
    %v338 = vld [vmem:[%s4] sm:$0x7]
    %v340 = vlaneseq
    %v341 = vshrl.u32 %v340, 7
    %v342 = vsub.s32 0, %v341
    %v343 = vrot.slane %v338, %v342
    %v344 = vlaneseq
    %v345 = vshrl.u32 %v344, 7
    %v346 = vsub.s32 1, %v345
    %v347 = vrot.slane %v338, %v346
    %v348 = vlaneseq
    %v349 = vshrl.u32 %v348, 7
    %v350 = vsub.s32 2, %v349
    %v351 = vrot.slane %v338, %v350
    %v483 = vunpack.c.l.b16 %v210
    %v484 = vunpack.c.h.b16 %v210
    %v485 = vunpack.c.l.b16 %v211
    %v486 = vunpack.c.l.b16 %v212
    %v487 = vunpack.c.h.b16 %v212
    %v488 = vunpack.c.l.b16 %v213
    %v489 = vunpack.c.l.b16 %v214
    %v490 = vunpack.c.h.b16 %v214
    %v491 = vunpack.c.l.b16 %v215
    %v492 = vunpack.c.l.b16 %v216
    %v493 = vunpack.c.h.b16 %v216
    %v494 = vunpack.c.l.b16 %v217
    %v495 = vunpack.c.l.b16 %v218
    %v496 = vunpack.c.h.b16 %v218
    %v497 = vunpack.c.l.b16 %v219
    %v498 = vunpack.c.l.b16 %v220
    %v499 = vunpack.c.h.b16 %v220
    %v500 = vunpack.c.l.b16 %v221
    %v501 = vunpack.c.l.b16 %v222
    %v502 = vunpack.c.h.b16 %v222
    %v503 = vunpack.c.l.b16 %v223
    %v504 = vunpack.c.l.b16 %v224
    %v505 = vunpack.c.h.b16 %v224
    %v506 = vunpack.c.l.b16 %v225
    %v507 = vunpack.c.l.b16 %v226
    %v508 = vunpack.c.h.b16 %v226
    %v509 = vunpack.c.l.b16 %v227
    %v510 = vunpack.c.l.b16 %v228
    %v511 = vunpack.c.h.b16 %v228
    %v512 = vunpack.c.l.b16 %v229
    %v513 = vunpack.c.l.b16 %v230
    %v514 = vunpack.c.h.b16 %v230
    %v515 = vunpack.c.l.b16 %v231
    %v516 = vunpack.c.l.b16 %v232
    %v517 = vunpack.c.h.b16 %v232
    %v518 = vunpack.c.l.b16 %v233
    %v519 = vunpack.c.l.b16 %v234
    %v520 = vunpack.c.h.b16 %v234
    %v521 = vunpack.c.l.b16 %v235
    %v522 = vunpack.c.l.b16 %v236
    %v523 = vunpack.c.h.b16 %v236
    %v524 = vunpack.c.l.b16 %v237
    %v525 = vunpack.c.l.b16 %v238
    %v526 = vunpack.c.h.b16 %v238
    %v527 = vunpack.c.l.b16 %v239
    %v528 = vunpack.c.l.b16 %v240
    %v529 = vunpack.c.h.b16 %v240
    %v530 = vunpack.c.l.b16 %v241
    %v531 = vunpack.c.l.b16 %v242
    %v532 = vunpack.c.h.b16 %v242
    %v533 = vunpack.c.l.b16 %v243
    %v534 = vunpack.c.l.b16 %v244
    %v535 = vunpack.c.h.b16 %v244
    %v536 = vunpack.c.l.b16 %v245
    %v537 = vunpack.c.l.b16 %v246
    %v538 = vunpack.c.h.b16 %v246
    %v539 = vunpack.c.l.b16 %v247
    %v540 = vunpack.c.l.b16 %v248
    %v541 = vunpack.c.h.b16 %v248
    %v542 = vunpack.c.l.b16 %v249
    %v543 = vunpack.c.l.b16 %v250
    %v544 = vunpack.c.h.b16 %v250
    %v545 = vunpack.c.l.b16 %v251
    %v546 = vunpack.c.l.b16 %v252
    %v547 = vunpack.c.h.b16 %v252
    %v548 = vunpack.c.l.b16 %v253
    %v549 = vunpack.c.l.b16 %v254
    %v550 = vunpack.c.h.b16 %v254
    %v551 = vunpack.c.l.b16 %v255
    %v552 = vunpack.c.l.b16 %v256
    %v553 = vunpack.c.h.b16 %v256
    %v554 = vunpack.c.l.b16 %v257
    %v555 = vunpack.c.l.b16 %v258
    %v556 = vunpack.c.h.b16 %v258
    %v557 = vunpack.c.l.b16 %v259
    %v558 = vunpack.c.l.b16 %v260
    %v559 = vunpack.c.h.b16 %v260
    %v560 = vunpack.c.l.b16 %v261
    %v561 = vunpack.c.l.b16 %v262
    %v562 = vunpack.c.h.b16 %v262
    %v563 = vunpack.c.l.b16 %v263
    %v564 = vunpack.c.l.b16 %v264
    %v565 = vunpack.c.h.b16 %v264
    %v566 = vunpack.c.l.b16 %v265
    %v567 = vunpack.c.l.b16 %v266
    %v568 = vunpack.c.h.b16 %v266
    %v569 = vunpack.c.l.b16 %v267
    %v570 = vunpack.c.l.b16 %v268
    %v571 = vunpack.c.h.b16 %v268
    %v572 = vunpack.c.l.b16 %v269
    %v573 = vunpack.c.l.b16 %v270
    %v574 = vunpack.c.h.b16 %v270
    %v575 = vunpack.c.l.b16 %v271
    %v576 = vunpack.c.l.b16 %v272
    %v577 = vunpack.c.h.b16 %v272
    %v578 = vunpack.c.l.b16 %v273
    %v579 = vunpack.c.l.b16 %v274
    %v580 = vunpack.c.h.b16 %v274
    %v581 = vunpack.c.l.b16 %v275
    %v582 = vunpack.c.l.b16 %v276
    %v583 = vunpack.c.h.b16 %v276
    %v584 = vunpack.c.l.b16 %v277
    %v585 = vunpack.c.l.b16 %v278
    %v586 = vunpack.c.h.b16 %v278
    %v587 = vunpack.c.l.b16 %v279
    %v588 = vunpack.c.l.b16 %v280
    %v589 = vunpack.c.h.b16 %v280
    %v590 = vunpack.c.l.b16 %v281
    %v591 = vunpack.c.l.b16 %v282
    %v592 = vunpack.c.h.b16 %v282
    %v593 = vunpack.c.l.b16 %v283
    %v594 = vunpack.c.l.b16 %v284
    %v595 = vunpack.c.h.b16 %v284
    %v596 = vunpack.c.l.b16 %v285
    %v597 = vunpack.c.l.b16 %v286
    %v598 = vunpack.c.h.b16 %v286
    %v599 = vunpack.c.l.b16 %v287
    %v600 = vunpack.c.l.b16 %v288
    %v601 = vunpack.c.h.b16 %v288
    %v602 = vunpack.c.l.b16 %v289
    %v603 = vunpack.c.l.b16 %v290
    %v604 = vunpack.c.h.b16 %v290
    %v605 = vunpack.c.l.b16 %v291
    %v606 = vunpack.c.l.b16 %v292
    %v607 = vunpack.c.h.b16 %v292
    %v608 = vunpack.c.l.b16 %v293
    %v609 = vunpack.c.l.b16 %v294
    %v610 = vunpack.c.h.b16 %v294
    %v611 = vunpack.c.l.b16 %v295
    %v612 = vunpack.c.l.b16 %v296
    %v613 = vunpack.c.h.b16 %v296
    %v614 = vunpack.c.l.b16 %v297
    %v615 = vunpack.c.l.b16 %v298
    %v616 = vunpack.c.h.b16 %v298
    %v617 = vunpack.c.l.b16 %v299
    %v618 = vunpack.c.l.b16 %v300
    %v619 = vunpack.c.h.b16 %v300
    %v620 = vunpack.c.l.b16 %v301
    %v621 = vunpack.c.l.b16 %v302
    %v622 = vunpack.c.h.b16 %v302
    %v623 = vunpack.c.l.b16 %v303
    %v624 = vunpack.c.l.b16 %v304
    %v625 = vunpack.c.h.b16 %v304
    %v626 = vunpack.c.l.b16 %v305
    %v627 = vunpack.c.l.b16 %v306
    %v628 = vunpack.c.h.b16 %v306
    %v629 = vunpack.c.l.b16 %v307
    %v630 = vunpack.c.l.b16 %v308
    %v631 = vunpack.c.h.b16 %v308
    %v632 = vunpack.c.l.b16 %v309
    %v633 = vunpack.c.l.b16 %v310
    %v634 = vunpack.c.h.b16 %v310
    %v635 = vunpack.c.l.b16 %v311
    %v636 = vunpack.c.l.b16 %v312
    %v637 = vunpack.c.h.b16 %v312
    %v638 = vunpack.c.l.b16 %v313
    %v639 = vunpack.c.l.b16 %v314
    %v640 = vunpack.c.h.b16 %v314
    %v641 = vunpack.c.l.b16 %v315
    %v642 = vunpack.c.l.b16 %v316
    %v643 = vunpack.c.h.b16 %v316
    %v644 = vunpack.c.l.b16 %v317
    %v645 = vunpack.c.l.b16 %v318
    %v646 = vunpack.c.h.b16 %v318
    %v647 = vunpack.c.l.b16 %v319
    %v648 = vunpack.c.l.b16 %v320
    %v649 = vunpack.c.h.b16 %v320
    %v650 = vunpack.c.l.b16 %v321
    %v651 = vunpack.c.l.b16 %v322
    %v652 = vunpack.c.h.b16 %v322
    %v653 = vunpack.c.l.b16 %v323
    %v654 = vunpack.c.l.b16 %v324
    %v655 = vunpack.c.h.b16 %v324
    %v656 = vunpack.c.l.b16 %v325
    %v657 = vunpack.c.l.b16 %v326
    %v658 = vunpack.c.h.b16 %v326
    %v659 = vunpack.c.l.b16 %v327
    %v660 = vunpack.c.l.b16 %v328
    %v661 = vunpack.c.h.b16 %v328
    %v662 = vunpack.c.l.b16 %v329
    %v663 = vunpack.c.l.b16 %v330
    %v664 = vunpack.c.h.b16 %v330
    %v665 = vunpack.c.l.b16 %v331
    %v666 = vunpack.c.l.b16 %v332
    %v667 = vunpack.c.h.b16 %v332
    %v668 = vunpack.c.l.b16 %v333
    %v669 = vunpack.c.l.b16 %v334
    %v670 = vunpack.c.h.b16 %v334
    %v671 = vunpack.c.l.b16 %v335
    %v672 = vunpack.c.l.b16 %v336
    %v673 = vunpack.c.h.b16 %v336
    %v674 = vunpack.c.l.b16 %v337
    %v675 = vpack.c.b16 %v486, %v483
    %v676 = vpack.c.b16 %v487, %v484
    %v677 = vpack.c.b16 %v488, %v485
    %v678 = vpack.c.b16 %v492, %v489
    %v679 = vpack.c.b16 %v493, %v490
    %v680 = vpack.c.b16 %v494, %v491
    %v681 = vpack.c.b16 %v498, %v495
    %v682 = vpack.c.b16 %v499, %v496
    %v683 = vpack.c.b16 %v500, %v497
    %v684 = vpack.c.b16 %v504, %v501
    %v685 = vpack.c.b16 %v505, %v502
    %v686 = vpack.c.b16 %v506, %v503
    %v687 = vpack.c.b16 %v510, %v507
    %v688 = vpack.c.b16 %v511, %v508
    %v689 = vpack.c.b16 %v512, %v509
    %v690 = vpack.c.b16 %v516, %v513
    %v691 = vpack.c.b16 %v517, %v514
    %v692 = vpack.c.b16 %v518, %v515
    %v693 = vpack.c.b16 %v522, %v519
    %v694 = vpack.c.b16 %v523, %v520
    %v695 = vpack.c.b16 %v524, %v521
    %v696 = vpack.c.b16 %v528, %v525
    %v697 = vpack.c.b16 %v529, %v526
    %v698 = vpack.c.b16 %v530, %v527
    %v699 = vpack.c.b16 %v534, %v531
    %v700 = vpack.c.b16 %v535, %v532
    %v701 = vpack.c.b16 %v536, %v533
    %v702 = vpack.c.b16 %v540, %v537
    %v703 = vpack.c.b16 %v541, %v538
    %v704 = vpack.c.b16 %v542, %v539
    %v705 = vpack.c.b16 %v546, %v543
    %v706 = vpack.c.b16 %v547, %v544
    %v707 = vpack.c.b16 %v548, %v545
    %v708 = vpack.c.b16 %v552, %v549
    %v709 = vpack.c.b16 %v553, %v550
    %v710 = vpack.c.b16 %v554, %v551
    %v711 = vpack.c.b16 %v558, %v555
    %v712 = vpack.c.b16 %v559, %v556
    %v713 = vpack.c.b16 %v560, %v557
    %v714 = vpack.c.b16 %v564, %v561
    %v715 = vpack.c.b16 %v565, %v562
    %v716 = vpack.c.b16 %v566, %v563
    %v717 = vpack.c.b16 %v570, %v567
    %v718 = vpack.c.b16 %v571, %v568
    %v719 = vpack.c.b16 %v572, %v569
    %v720 = vpack.c.b16 %v576, %v573
    %v721 = vpack.c.b16 %v577, %v574
    %v722 = vpack.c.b16 %v578, %v575
    %v723 = vpack.c.b16 %v582, %v579
    %v724 = vpack.c.b16 %v583, %v580
    %v725 = vpack.c.b16 %v584, %v581
    %v726 = vpack.c.b16 %v588, %v585
    %v727 = vpack.c.b16 %v589, %v586
    %v728 = vpack.c.b16 %v590, %v587
    %v729 = vpack.c.b16 %v594, %v591
    %v730 = vpack.c.b16 %v595, %v592
    %v731 = vpack.c.b16 %v596, %v593
    %v732 = vpack.c.b16 %v600, %v597
    %v733 = vpack.c.b16 %v601, %v598
    %v734 = vpack.c.b16 %v602, %v599
    %v735 = vpack.c.b16 %v606, %v603
    %v736 = vpack.c.b16 %v607, %v604
    %v737 = vpack.c.b16 %v608, %v605
    %v738 = vpack.c.b16 %v612, %v609
    %v739 = vpack.c.b16 %v613, %v610
    %v740 = vpack.c.b16 %v614, %v611
    %v741 = vpack.c.b16 %v618, %v615
    %v742 = vpack.c.b16 %v619, %v616
    %v743 = vpack.c.b16 %v620, %v617
    %v744 = vpack.c.b16 %v624, %v621
    %v745 = vpack.c.b16 %v625, %v622
    %v746 = vpack.c.b16 %v626, %v623
    %v747 = vpack.c.b16 %v630, %v627
    %v748 = vpack.c.b16 %v631, %v628
    %v749 = vpack.c.b16 %v632, %v629
    %v750 = vpack.c.b16 %v636, %v633
    %v751 = vpack.c.b16 %v637, %v634
    %v752 = vpack.c.b16 %v638, %v635
    %v753 = vpack.c.b16 %v642, %v639
    %v754 = vpack.c.b16 %v643, %v640
    %v755 = vpack.c.b16 %v644, %v641
    %v756 = vpack.c.b16 %v648, %v645
    %v757 = vpack.c.b16 %v649, %v646
    %v758 = vpack.c.b16 %v650, %v647
    %v759 = vpack.c.b16 %v654, %v651
    %v760 = vpack.c.b16 %v655, %v652
    %v761 = vpack.c.b16 %v656, %v653
    %v762 = vpack.c.b16 %v660, %v657
    %v763 = vpack.c.b16 %v661, %v658
    %v764 = vpack.c.b16 %v662, %v659
    %v765 = vpack.c.b16 %v666, %v663
    %v766 = vpack.c.b16 %v667, %v664
    %v767 = vpack.c.b16 %v668, %v665
    %v768 = vpack.c.b16 %v672, %v669
    %v769 = vpack.c.b16 %v673, %v670
    %v770 = vpack.c.b16 %v674, %v671
    %867 = vmatprep.subr.bf16.mxu0 %v676
    %868 = vmatpush1.bf16.msra.mxu0 %v675
    %869 = vmatprep.subr.bf16.mxu0 %v679
    %870 = vmatpush1.bf16.msra.mxu0 %v678
    %871 = vmatprep.subr.bf16.mxu0 %v682
    %872 = vmatpush1.bf16.msra.mxu0 %v681
    %873 = vmatprep.subr.bf16.mxu0 %v685
    %874 = vmatpush1.bf16.msra.mxu0 %v684
    %875 = vmatprep.subr.bf16.mxu0 %v688
    %876 = vmatpush1.bf16.msra.mxu0 %v687
    %877 = vmatprep.subr.bf16.mxu0 %v691
    %878 = vmatpush1.bf16.msra.mxu0 %v690
    %879 = vmatprep.subr.bf16.mxu0 %v694
    %880 = vmatpush1.bf16.msra.mxu0 %v693
    %881 = vmatprep.subr.bf16.mxu0 %v697
    %882 = vmatpush1.bf16.msra.mxu0 %v696
    %883 = vmatprep.subr.bf16.mxu0 %v700
    %884 = vmatpush1.bf16.msra.mxu0 %v699
    %885 = vmatprep.subr.bf16.mxu0 %v703
    %886 = vmatpush1.bf16.msra.mxu0 %v702
    %887 = vmatprep.subr.bf16.mxu0 %v706
    %888 = vmatpush1.bf16.msra.mxu0 %v705
    %889 = vmatprep.subr.bf16.mxu0 %v709
    %890 = vmatpush1.bf16.msra.mxu0 %v708
    %891 = vmatprep.subr.bf16.mxu0 %v712
    %892 = vmatpush1.bf16.msra.mxu0 %v711
    %893 = vmatprep.subr.bf16.mxu0 %v715
    %894 = vmatpush1.bf16.msra.mxu0 %v714
    %895 = vmatprep.subr.bf16.mxu0 %v718
    %896 = vmatpush1.bf16.msra.mxu0 %v717
    %897 = vmatprep.subr.bf16.mxu0 %v721
    %898 = vmatpush1.bf16.msra.mxu0 %v720
    %899 = vmatprep.mubr.bf16.mxu0 %v207
    %900 = vmatmul.mubr.bf16.gmra.mrb[0].mxu0 %v206
    %v901 = vpop.f32.mrb[0].mxu0
    %v902 = vadd.f32 %v343, %v901
    %v903 = vpop.f32.mrb[0].mxu0
    %v904 = vadd.f32 %v347, %v903
    %v905 = vpop.f32.mrb[0].mxu0
    %v906 = vpop.f32.mrb[0].mxu0
    %907 = vdwg.mxu0
    %908 = vmatprep.subr.bf16.mxu0 %v724
    %909 = vmatpush1.bf16.msra.mxu0 %v723
    %910 = vmatprep.subr.bf16.mxu0 %v727
    %911 = vmatpush1.bf16.msra.mxu0 %v726
    %912 = vmatprep.subr.bf16.mxu0 %v730
    %913 = vmatpush1.bf16.msra.mxu0 %v729
    %914 = vmatprep.subr.bf16.mxu0 %v733
    %915 = vmatpush1.bf16.msra.mxu0 %v732
    %916 = vmatprep.subr.bf16.mxu0 %v736
    %917 = vmatpush1.bf16.msra.mxu0 %v735
    %918 = vmatprep.subr.bf16.mxu0 %v739
    %919 = vmatpush1.bf16.msra.mxu0 %v738
    %920 = vmatprep.subr.bf16.mxu0 %v742
    %921 = vmatpush1.bf16.msra.mxu0 %v741
    %922 = vmatprep.subr.bf16.mxu0 %v745
    %923 = vmatpush1.bf16.msra.mxu0 %v744
    %924 = vmatprep.subr.bf16.mxu0 %v748
    %925 = vmatpush1.bf16.msra.mxu0 %v747
    %926 = vmatprep.subr.bf16.mxu0 %v751
    %927 = vmatpush1.bf16.msra.mxu0 %v750
    %928 = vmatprep.subr.bf16.mxu0 %v754
    %929 = vmatpush1.bf16.msra.mxu0 %v753
    %930 = vmatprep.subr.bf16.mxu0 %v757
    %931 = vmatpush1.bf16.msra.mxu0 %v756
    %932 = vmatprep.subr.bf16.mxu0 %v760
    %933 = vmatpush1.bf16.msra.mxu0 %v759
    %934 = vmatprep.subr.bf16.mxu0 %v763
    %935 = vmatpush1.bf16.msra.mxu0 %v762
    %936 = vmatprep.subr.bf16.mxu0 %v766
    %937 = vmatpush1.bf16.msra.mxu0 %v765
    %938 = vmatprep.subr.bf16.mxu0 %v769
    %939 = vmatpush1.bf16.msra.mxu0 %v768
    %940 = vmatprep.mubr.bf16.mxu0 %v209
    %941 = vmatmul.mubr.bf16.gmra.mrb[0].mxu0 %v208
    %v942 = vpop.f32.mrb[0].mxu0
    %v943 = vadd.f32 %v902, %v942
    %v944 = vpop.f32.mrb[0].mxu0
    %v945 = vadd.f32 %v904, %v944
    %v946 = vpop.f32.mrb[0].mxu0
    %v947 = vpop.f32.mrb[0].mxu0
    %948 = vdwg.mxu0
    %949 = vmatprep.subr.bf16.mxu0 0
    %950 = vmatpush1.bf16.msra.mxu0 %v677
    %951 = vmatprep.subr.bf16.mxu0 0
    %952 = vmatpush1.bf16.msra.mxu0 %v680
    %953 = vmatprep.subr.bf16.mxu0 0
    %954 = vmatpush1.bf16.msra.mxu0 %v683
    %955 = vmatprep.subr.bf16.mxu0 0
    %956 = vmatpush1.bf16.msra.mxu0 %v686
    %957 = vmatprep.subr.bf16.mxu0 0
    %958 = vmatpush1.bf16.msra.mxu0 %v689
    %959 = vmatprep.subr.bf16.mxu0 0
    %960 = vmatpush1.bf16.msra.mxu0 %v692
    %961 = vmatprep.subr.bf16.mxu0 0
    %962 = vmatpush1.bf16.msra.mxu0 %v695
    %963 = vmatprep.subr.bf16.mxu0 0
    %964 = vmatpush1.bf16.msra.mxu0 %v698
    %965 = vmatprep.subr.bf16.mxu0 0
    %966 = vmatpush1.bf16.msra.mxu0 %v701
    %967 = vmatprep.subr.bf16.mxu0 0
    %968 = vmatpush1.bf16.msra.mxu0 %v704
    %969 = vmatprep.subr.bf16.mxu0 0
    %970 = vmatpush1.bf16.msra.mxu0 %v707
    %971 = vmatprep.subr.bf16.mxu0 0
    %972 = vmatpush1.bf16.msra.mxu0 %v710
    %973 = vmatprep.subr.bf16.mxu0 0
    %974 = vmatpush1.bf16.msra.mxu0 %v713
    %975 = vmatprep.subr.bf16.mxu0 0
    %976 = vmatpush1.bf16.msra.mxu0 %v716
    %977 = vmatprep.subr.bf16.mxu0 0
    %978 = vmatpush1.bf16.msra.mxu0 %v719
    %979 = vmatprep.subr.bf16.mxu0 0
    %980 = vmatpush1.bf16.msra.mxu0 %v722
    %981 = vmatprep.mubr.bf16.mxu0 %v207
    %982 = vmatmul.mubr.bf16.gmra.mrb[0].mxu0 %v206
    %v983 = vpop.f32.mrb[0].mxu0
    %v984 = vadd.f32 %v351, %v983
    %v985 = vpop.f32.mrb[0].mxu0
    %v986 = vpop.f32.mrb[0].mxu0
    %v987 = vpop.f32.mrb[0].mxu0
    %988 = vdwg.mxu0
    %989 = vmatprep.subr.bf16.mxu0 0
    %990 = vmatpush1.bf16.msra.mxu0 %v725
    %991 = vmatprep.subr.bf16.mxu0 0
    %992 = vmatpush1.bf16.msra.mxu0 %v728
    %993 = vmatprep.subr.bf16.mxu0 0
    %994 = vmatpush1.bf16.msra.mxu0 %v731
    %995 = vmatprep.subr.bf16.mxu0 0
    %996 = vmatpush1.bf16.msra.mxu0 %v734
    %997 = vmatprep.subr.bf16.mxu0 0
    %998 = vmatpush1.bf16.msra.mxu0 %v737
    %999 = vmatprep.subr.bf16.mxu0 0
    %1000 = vmatpush1.bf16.msra.mxu0 %v740
    %1001 = vmatprep.subr.bf16.mxu0 0
    %1002 = vmatpush1.bf16.msra.mxu0 %v743
    %1003 = vmatprep.subr.bf16.mxu0 0
    %1004 = vmatpush1.bf16.msra.mxu0 %v746
    %1005 = vmatprep.subr.bf16.mxu0 0
    %1006 = vmatpush1.bf16.msra.mxu0 %v749
    %1007 = vmatprep.subr.bf16.mxu0 0
    %1008 = vmatpush1.bf16.msra.mxu0 %v752
    %1009 = vmatprep.subr.bf16.mxu0 0
    %1010 = vmatpush1.bf16.msra.mxu0 %v755
    %1011 = vmatprep.subr.bf16.mxu0 0
    %1012 = vmatpush1.bf16.msra.mxu0 %v758
    %1013 = vmatprep.subr.bf16.mxu0 0
    %1014 = vmatpush1.bf16.msra.mxu0 %v761
    %1015 = vmatprep.subr.bf16.mxu0 0
    %1016 = vmatpush1.bf16.msra.mxu0 %v764
    %1017 = vmatprep.subr.bf16.mxu0 0
    %1018 = vmatpush1.bf16.msra.mxu0 %v767
    %1019 = vmatprep.subr.bf16.mxu0 0
    %1020 = vmatpush1.bf16.msra.mxu0 %v770
    %1021 = vmatprep.mubr.bf16.mxu0 %v209
    %1022 = vmatmul.mubr.bf16.gmra.mrb[0].mxu0 %v208
    %v1023 = vpop.f32.mrb[0].mxu0
    %v1024 = vadd.f32 %v984, %v1023
    %v1025 = vpop.f32.mrb[0].mxu0
    %v1026 = vpop.f32.mrb[0].mxu0
    %v1027 = vpop.f32.mrb[0].mxu0
    %1028 = vdwg.mxu0
    %v1029 = vmax.f32 %v943, 0.0
    %v1030 = vmax.f32 %v945, 0.0
    %v1031 = vmax.f32 %v1024, 0.0
    %v1032 = vpack.c.bf16 %v1029, %v1029
    %v1033 = vpack.c.bf16 %v1030, %v1030
    %v1034 = vpack.c.bf16 %v1031, %v1031
    %v1035 = vld [vmem:[#allocation7] sm:$0xf]
    %v1036 = vld [vmem:[#allocation7 + $0x4] sm:$0xf]
    %v1037 = vld [vmem:[#allocation7 + $0x8] sm:$0xf]
    %v1038 = vld [vmem:[#allocation7 + $0xc] sm:$0xf]
    %v1039 = vld [vmem:[#allocation7 + $0x10] sm:$0xf]
    %v1040 = vld [vmem:[#allocation7 + $0x14] sm:$0xf]
    %v1041 = vld [vmem:[#allocation7 + $0x18] sm:$0xf]
    %v1042 = vld [vmem:[#allocation7 + $0x1c] sm:$0xf]
    %v1043 = vld [vmem:[#allocation7 + $0x20] sm:$0xf]
    %v1044 = vld [vmem:[#allocation7 + $0x24] sm:$0xf]
    %v1045 = vld [vmem:[#allocation7 + $0x28] sm:$0xf]
    %v1046 = vld [vmem:[#allocation7 + $0x2c] sm:$0xf]
    %v1047 = vld [vmem:[#allocation7 + $0x30] sm:$0xf]
    %v1048 = vld [vmem:[#allocation7 + $0x34] sm:$0xf]
    %v1049 = vld [vmem:[#allocation7 + $0x38] sm:$0xf]
    %v1050 = vld [vmem:[#allocation7 + $0x3c] sm:$0xf]
    %v1051 = vld [vmem:[#allocation7 + $0x40] sm:$0xf]
    %v1052 = vld [vmem:[#allocation7 + $0x44] sm:$0xf]
    %v1053 = vld [vmem:[#allocation7 + $0x48] sm:$0xf]
    %v1054 = vld [vmem:[#allocation7 + $0x4c] sm:$0xf]
    %v1055 = vld [vmem:[#allocation7 + $0x50] sm:$0xf]
    %v1056 = vld [vmem:[#allocation7 + $0x54] sm:$0xf]
    %v1057 = vld [vmem:[#allocation7 + $0x58] sm:$0xf]
    %v1058 = vld [vmem:[#allocation7 + $0x5c] sm:$0xf]
    %v1059 = vld [vmem:[#allocation7 + $0x60] sm:$0xf]
    %v1060 = vld [vmem:[#allocation7 + $0x64] sm:$0xf]
    %v1061 = vld [vmem:[#allocation7 + $0x68] sm:$0xf]
    %v1062 = vld [vmem:[#allocation7 + $0x6c] sm:$0xf]
    %v1063 = vld [vmem:[#allocation7 + $0x70] sm:$0xf]
    %v1064 = vld [vmem:[#allocation7 + $0x74] sm:$0xf]
    %v1065 = vld [vmem:[#allocation7 + $0x78] sm:$0xf]
    %v1066 = vld [vmem:[#allocation7 + $0x7c] sm:$0xf]
    %v1067 = vld [vmem:[#allocation7 + $0x80] sm:$0xf]
    %v1068 = vld [vmem:[#allocation7 + $0x84] sm:$0xf]
    %v1069 = vld [vmem:[#allocation7 + $0x88] sm:$0xf]
    %v1070 = vld [vmem:[#allocation7 + $0x8c] sm:$0xf]
    %v1071 = vld [vmem:[#allocation7 + $0x90] sm:$0xf]
    %v1072 = vld [vmem:[#allocation7 + $0x94] sm:$0xf]
    %v1073 = vld [vmem:[#allocation7 + $0x98] sm:$0xf]
    %v1074 = vld [vmem:[#allocation7 + $0x9c] sm:$0xf]
    %v1075 = vld [vmem:[#allocation7 + $0xa0] sm:$0xf]
    %v1076 = vld [vmem:[#allocation7 + $0xa4] sm:$0xf]
    %v1077 = vld [vmem:[#allocation7 + $0xa8] sm:$0xf]
    %v1078 = vld [vmem:[#allocation7 + $0xac] sm:$0xf]
    %v1079 = vld [vmem:[#allocation7 + $0xb0] sm:$0xf]
    %v1080 = vld [vmem:[#allocation7 + $0xb4] sm:$0xf]
    %v1081 = vld [vmem:[#allocation7 + $0xb8] sm:$0xf]
    %v1082 = vld [vmem:[#allocation7 + $0xbc] sm:$0xf]
    %v1083 = vld [vmem:[%s6] sm:$0x1]
    %v1085 = vlaneseq
    %v1086 = vshrl.u32 %v1085, 7
    %v1087 = vsub.s32 0, %v1086
    %v1088 = vrot.slane %v1083, %v1087
    %v1138 = vunpack.c.l.b16 %v1035
    %v1139 = vunpack.c.l.b16 %v1036
    %v1140 = vunpack.c.l.b16 %v1037
    %v1141 = vunpack.c.l.b16 %v1038
    %v1142 = vunpack.c.l.b16 %v1039
    %v1143 = vunpack.c.l.b16 %v1040
    %v1144 = vunpack.c.l.b16 %v1041
    %v1145 = vunpack.c.l.b16 %v1042
    %v1146 = vunpack.c.l.b16 %v1043
    %v1147 = vunpack.c.l.b16 %v1044
    %v1148 = vunpack.c.l.b16 %v1045
    %v1149 = vunpack.c.l.b16 %v1046
    %v1150 = vunpack.c.l.b16 %v1047
    %v1151 = vunpack.c.l.b16 %v1048
    %v1152 = vunpack.c.l.b16 %v1049
    %v1153 = vunpack.c.l.b16 %v1050
    %v1154 = vunpack.c.l.b16 %v1051
    %v1155 = vunpack.c.l.b16 %v1052
    %v1156 = vunpack.c.l.b16 %v1053
    %v1157 = vunpack.c.l.b16 %v1054
    %v1158 = vunpack.c.l.b16 %v1055
    %v1159 = vunpack.c.l.b16 %v1056
    %v1160 = vunpack.c.l.b16 %v1057
    %v1161 = vunpack.c.l.b16 %v1058
    %v1162 = vunpack.c.l.b16 %v1059
    %v1163 = vunpack.c.l.b16 %v1060
    %v1164 = vunpack.c.l.b16 %v1061
    %v1165 = vunpack.c.l.b16 %v1062
    %v1166 = vunpack.c.l.b16 %v1063
    %v1167 = vunpack.c.l.b16 %v1064
    %v1168 = vunpack.c.l.b16 %v1065
    %v1169 = vunpack.c.l.b16 %v1066
    %v1170 = vunpack.c.l.b16 %v1067
    %v1171 = vunpack.c.l.b16 %v1068
    %v1172 = vunpack.c.l.b16 %v1069
    %v1173 = vunpack.c.l.b16 %v1070
    %v1174 = vunpack.c.l.b16 %v1071
    %v1175 = vunpack.c.l.b16 %v1072
    %v1176 = vunpack.c.l.b16 %v1073
    %v1177 = vunpack.c.l.b16 %v1074
    %v1178 = vunpack.c.l.b16 %v1075
    %v1179 = vunpack.c.l.b16 %v1076
    %v1180 = vunpack.c.l.b16 %v1077
    %v1181 = vunpack.c.l.b16 %v1078
    %v1182 = vunpack.c.l.b16 %v1079
    %v1183 = vunpack.c.l.b16 %v1080
    %v1184 = vunpack.c.l.b16 %v1081
    %v1185 = vunpack.c.l.b16 %v1082
    %v1186 = vpack.c.b16 %v1139, %v1138
    %v1187 = vpack.c.b16 %v1141, %v1140
    %v1188 = vpack.c.b16 %v1143, %v1142
    %v1189 = vpack.c.b16 %v1145, %v1144
    %v1190 = vpack.c.b16 %v1147, %v1146
    %v1191 = vpack.c.b16 %v1149, %v1148
    %v1192 = vpack.c.b16 %v1151, %v1150
    %v1193 = vpack.c.b16 %v1153, %v1152
    %v1194 = vpack.c.b16 %v1155, %v1154
    %v1195 = vpack.c.b16 %v1157, %v1156
    %v1196 = vpack.c.b16 %v1159, %v1158
    %v1197 = vpack.c.b16 %v1161, %v1160
    %v1198 = vpack.c.b16 %v1163, %v1162
    %v1199 = vpack.c.b16 %v1165, %v1164
    %v1200 = vpack.c.b16 %v1167, %v1166
    %v1201 = vpack.c.b16 %v1169, %v1168
    %v1202 = vpack.c.b16 %v1171, %v1170
    %v1203 = vpack.c.b16 %v1173, %v1172
    %v1204 = vpack.c.b16 %v1175, %v1174
    %v1205 = vpack.c.b16 %v1177, %v1176
    %v1206 = vpack.c.b16 %v1179, %v1178
    %v1207 = vpack.c.b16 %v1181, %v1180
    %v1208 = vpack.c.b16 %v1183, %v1182
    %v1209 = vpack.c.b16 %v1185, %v1184
    %1234 = vmatprep.subr.bf16.mxu0 0
    %1235 = vmatpush1.bf16.msra.mxu0 %v1186
    %1236 = vmatprep.subr.bf16.mxu0 0
    %1237 = vmatpush1.bf16.msra.mxu0 %v1187
    %1238 = vmatprep.subr.bf16.mxu0 0
    %1239 = vmatpush1.bf16.msra.mxu0 %v1188
    %1240 = vmatprep.subr.bf16.mxu0 0
    %1241 = vmatpush1.bf16.msra.mxu0 %v1189
    %1242 = vmatprep.subr.bf16.mxu0 0
    %1243 = vmatpush1.bf16.msra.mxu0 %v1190
    %1244 = vmatprep.subr.bf16.mxu0 0
    %1245 = vmatpush1.bf16.msra.mxu0 %v1191
    %1246 = vmatprep.subr.bf16.mxu0 0
    %1247 = vmatpush1.bf16.msra.mxu0 %v1192
    %1248 = vmatprep.subr.bf16.mxu0 0
    %1249 = vmatpush1.bf16.msra.mxu0 %v1193
    %1250 = vmatprep.subr.bf16.mxu0 0
    %1251 = vmatpush1.bf16.msra.mxu0 %v1194
    %1252 = vmatprep.subr.bf16.mxu0 0
    %1253 = vmatpush1.bf16.msra.mxu0 %v1195
    %1254 = vmatprep.subr.bf16.mxu0 0
    %1255 = vmatpush1.bf16.msra.mxu0 %v1196
    %1256 = vmatprep.subr.bf16.mxu0 0
    %1257 = vmatpush1.bf16.msra.mxu0 %v1197
    %1258 = vmatprep.subr.bf16.mxu0 0
    %1259 = vmatpush1.bf16.msra.mxu0 %v1198
    %1260 = vmatprep.subr.bf16.mxu0 0
    %1261 = vmatpush1.bf16.msra.mxu0 %v1199
    %1262 = vmatprep.subr.bf16.mxu0 0
    %1263 = vmatpush1.bf16.msra.mxu0 %v1200
    %1264 = vmatprep.subr.bf16.mxu0 0
    %1265 = vmatpush1.bf16.msra.mxu0 %v1201
    %1266 = vmatprep.mubr.bf16.mxu0 %v1033
    %1267 = vmatmul.mubr.bf16.gmra.mrb[0].mxu0 %v1032
    %v1268 = vpop.f32.mrb[0].mxu0
    %v1269 = vadd.f32 %v1088, %v1268
    %v1270 = vpop.f32.mrb[0].mxu0
    %v1271 = vpop.f32.mrb[0].mxu0
    %v1272 = vpop.f32.mrb[0].mxu0
    %1273 = vdwg.mxu0
    %1274 = vmatprep.subr.bf16.mxu0 0
    %1275 = vmatpush1.bf16.msra.mxu0 %v1202
    %1276 = vmatprep.subr.bf16.mxu0 0
    %1277 = vmatpush1.bf16.msra.mxu0 %v1203
    %1278 = vmatprep.subr.bf16.mxu0 0
    %1279 = vmatpush1.bf16.msra.mxu0 %v1204
    %1280 = vmatprep.subr.bf16.mxu0 0
    %1281 = vmatpush1.bf16.msra.mxu0 %v1205
    %1282 = vmatprep.subr.bf16.mxu0 0
    %1283 = vmatpush1.bf16.msra.mxu0 %v1206
    %1284 = vmatprep.subr.bf16.mxu0 0
    %1285 = vmatpush1.bf16.msra.mxu0 %v1207
    %1286 = vmatprep.subr.bf16.mxu0 0
    %1287 = vmatpush1.bf16.msra.mxu0 %v1208
    %1288 = vmatprep.subr.bf16.mxu0 0
    %1289 = vmatpush1.bf16.msra.mxu0 %v1209
    %1290 = vmatprep.subr.bf16.mxu0 0
    %1291 = vmatpush1.bf16.msra.mxu0 0
    %1292 = vmatprep.subr.bf16.mxu0 0
    %1293 = vmatpush1.bf16.msra.mxu0 0
    %1294 = vmatprep.subr.bf16.mxu0 0
    %1295 = vmatpush1.bf16.msra.mxu0 0
    %1296 = vmatprep.subr.bf16.mxu0 0
    %1297 = vmatpush1.bf16.msra.mxu0 0
    %1298 = vmatprep.subr.bf16.mxu0 0
    %1299 = vmatpush1.bf16.msra.mxu0 0
    %1300 = vmatprep.subr.bf16.mxu0 0
    %1301 = vmatpush1.bf16.msra.mxu0 0
    %1302 = vmatprep.subr.bf16.mxu0 0
    %1303 = vmatpush1.bf16.msra.mxu0 0
    %1304 = vmatprep.subr.bf16.mxu0 0
    %1305 = vmatpush1.bf16.msra.mxu0 0
    %1306 = vmatprep.mubr.bf16.mxu0 0
    %1307 = vmatmul.mubr.bf16.gmra.mrb[0].mxu0 %v1034
    %v1308 = vpop.f32.mrb[0].mxu0
    %v1309 = vadd.f32 %v1269, %v1308
    %v1310 = vpop.f32.mrb[0].mxu0
    %v1311 = vpop.f32.mrb[0].mxu0
    %v1312 = vpop.f32.mrb[0].mxu0
    %1313 = vdwg.mxu0
    %v1314 = vtanh.pop %v1309
    %1315 = vst [vmem:[#allocation8] sm:$0xf] %v1314
    // Predicated region
    $region42: #{actor_forward.1} parent=1 // pred_check
      _
    $region43: #{actor_forward.1} parent=1 // pred_check_branch
      %1317 = sbr.rel (0) target = $region45
    $region44: #{actor_forward.1} parent=1 // pred_region
      %s1319 = ssub.s32 64, 64
      %1320 = vsyncadd [#allocation4], %s1319
      %s1322 = sshll.u32 [#allocation8], 4
      %s1323 = int_to_ptr.vmem [resolvable:$true] %s1322
      %1325 = dma.vmem_to_hbm [thread:$0]  %s1323, 64, %s7, [#allocation4]
    $region45: #{actor_forward.1} parent=1 // pred_fallthru
      _
    // Predicated region
    $region46: #{actor_forward.1} parent=1 // pred_check
      _
    $region47: #{actor_forward.1} parent=1 // pred_check_branch
      %1327 = sbr.rel (0) target = $region49
    $region48: #{actor_forward.1} parent=1 // pred_region
      %1328 = dma.done [#allocation4], 64
    $region49: #{actor_forward.1} parent=1 // pred_fallthru
      _
    %1329 = vsyncpa [#allocation3], 1
    %1330 = vsyncpa [#allocation6], 1
    %1331 = vsyncpa [#allocation4], 1

</llo_original>
